<compile_context>
chip_gen: v7x
topology: tpu7x:2x2x1
jax: 0.10.0
libtpu: 0.0.40
codegen_flags: <defaults>
</compile_context>

<pallas_src>
import functools

import jax
import jax.numpy as jnp
from jax import lax
from jax.experimental import pallas as pl
from jax.experimental.pallas import tpu as pltpu


def _sepconv_kernel(x_ref, dwb_ref, pwb_ref, o_ref, *, K, Wp2):
    # x_ref  : (1, C, Hp2*Wp2)   edge-padded input, spatial flattened on lanes
    # dwb_ref: (K*K, C, 1)       depthwise weights, tap-major (f32)
    # pwb_ref: (C, Cout, 1)      pointwise (1x1) weights (f32)
    # o_ref  : (1, Cout, Hout*Wp2)  lane-dense output (Hout*Wp2 % 128 == 0)
    C = x_ref.shape[1]
    Cout = o_ref.shape[1]
    L_out = o_ref.shape[2]  # Hout * Wp2

    # Depthwise conv: K*K unrolled lane-shifted FMAs into a (C, L_out) f32
    # accumulator.  Each tap is a contiguous slice at offset kh*Wp2 + kw of the
    # flattened padded image (shift goes to load/XLU slots; VALU stays the only
    # busy unit).  Shifted patches are consumed immediately.
    acc = jnp.zeros((C, L_out), jnp.float32)
    for kh in range(K):
        for kw in range(K):
            off = kh * Wp2 + kw  # static offset
            patch = x_ref[0, :, pl.ds(off, L_out)].astype(jnp.float32)
            acc = acc + patch * dwb_ref[kh * K + kw]  # (C,L) * (C,1) lane-bcast

    # Pointwise 1x1 conv on the VPU (no MXU): out[co,:] += pw[c,co] * acc[c,:].
    # (1,L) sublane-broadcast x (Cout,1) lane-broadcast -> (Cout, L) FMA.
    out = jnp.zeros((Cout, L_out), jnp.float32)
    for c in range(C):
        out = out + acc[c:c + 1, :] * pwb_ref[c]

    o_ref[0] = out.astype(o_ref.dtype)


def separable_conv2d(x_nchw, dw_weight, pw_weight, padding):
    """x_nchw: (N,C,H,W); dw_weight: (C,1,K,K); pw_weight: (Cout,C,1,1)."""
    N, C, H, W = x_nchw.shape
    K = dw_weight.shape[-1]
    Cout = pw_weight.shape[0]
    Hout = H + 2 * padding - (K - 1)
    Wout = W + 2 * padding - (K - 1)

    # --- padded / flattened geometry -------------------------------------
    # Columns [0, W + 2*padding) must carry the true replicate padding; extra
    # right columns are junk (never used by valid outputs) but keep the flat
    # lane shifts in-bounds and make Hout*Wp2 a multiple of 128 (lane-dense,
    # unmasked vst).  For H=W=16, K=3, pad=1 this gives Wp2=24, Hout*Wp2=384.
    Wvalid = W + 2 * padding
    Wp2 = Wvalid
    while (Hout * Wp2) % 128 != 0 and Wp2 < Wvalid + 128:
        Wp2 += 1
    # Rows: Hout + K - 1 valid rows plus enough junk rows so the largest
    # shifted flat read (offset (K-1)*Wp2 + K-1) stays in-bounds.
    Hp2 = Hout + K - 1 + ((K - 1 + Wp2 - 1) // Wp2 if K > 1 else 0)

    pad_h = (padding, Hp2 - H - padding)
    pad_w = (padding, Wp2 - W - padding)
    x_pad = jnp.pad(x_nchw, ((0, 0), (0, 0), pad_h, pad_w), mode="edge")
    # TODO(synk): replicate padding could be folded into the kernel via clamped
    # pl.ds starts to drop this one remaining wrapper-side XLA op.
    Lin = Hp2 * Wp2
    Lout = Hout * Wp2
    x_flat = x_pad.reshape(N, C, Lin)  # contiguous reshape (free)

    # Weights: tap-major depthwise (K*K, C, 1) and pointwise (C, Cout, 1),
    # pre-cast to f32 in the wrapper (hoisted out of the unrolled tap loop).
    dwb = jnp.transpose(dw_weight[:, 0, :, :], (1, 2, 0)).reshape(K * K, C)
    dwb = dwb.astype(jnp.float32)[:, :, None]
    pwb = jnp.transpose(pw_weight[:, :, 0, 0], (1, 0)).astype(jnp.float32)
    pwb = pwb[:, :, None]

    out_flat = pl.pallas_call(
        functools.partial(_sepconv_kernel, K=K, Wp2=Wp2),
        out_shape=jax.ShapeDtypeStruct((N, Cout, Lout), x_nchw.dtype),
        grid_spec=pltpu.PrefetchScalarGridSpec(
            num_scalar_prefetch=0,
            grid=(N,),
            in_specs=[
                pl.BlockSpec((1, C, Lin), lambda n: (n, 0, 0)),
                pl.BlockSpec((K * K, C, 1), lambda n: (0, 0, 0)),
                pl.BlockSpec((C, Cout, 1), lambda n: (0, 0, 0)),
            ],
            out_specs=pl.BlockSpec((1, Cout, Lout), lambda n: (n, 0, 0)),
        ),
        compiler_params=pltpu.CompilerParams(
            dimension_semantics=("parallel",)),
    )(x_flat, dwb, pwb)

    # Drop the junk columns: contiguous reshape + static slice, already NCHW.
    out = out_flat.reshape(N, Cout, Hout, Wp2)[:, :, :, :Wout]
    return out


def _reference(x_nchw, dw_weight, pw_weight, padding):
    """Pure-JAX reference (lax conv) of the same forward pass."""
    x_pad = jnp.pad(
        x_nchw, ((0, 0), (0, 0), (padding, padding), (padding, padding)),
        mode="edge")
    C = x_nchw.shape[1]
    dw_out = lax.conv_general_dilated(
        x_pad, dw_weight, window_strides=(1, 1), padding="VALID",
        dimension_numbers=("NCHW", "OIHW", "NCHW"), feature_group_count=C)
    pw_out = lax.conv_general_dilated(
        dw_out, pw_weight, window_strides=(1, 1), padding="VALID",
        dimension_numbers=("NCHW", "OIHW", "NCHW"))
    return pw_out


if __name__ == "__main__":
    # Module config: SeparableConv2d(in_channels=4, out_channels=8,
    #                                kernel_size=3, padding=1, bias=False,
    #                                padding_mode='replicate')
    N, Cin, Hs, Ws = 2, 4, 16, 16
    Cout, K, PAD = 8, 3, 1

    key = jax.random.PRNGKey(0)
    kx, kdw, kpw = jax.random.split(key, 3)
    x = jax.random.normal(kx, (N, Cin, Hs, Ws), dtype=jnp.float32)
    dw_weight = jax.random.normal(kdw, (Cin, 1, K, K), dtype=jnp.float32) * 0.1
    pw_weight = jax.random.normal(kpw, (Cout, Cin, 1, 1), dtype=jnp.float32) * 0.1

    out = separable_conv2d(x, dw_weight, pw_weight, PAD)
    out = jax.block_until_ready(out)

    ref = _reference(x, dw_weight, pw_weight, PAD)
    assert out.shape == (N, Cout, Hs, Ws), out.shape
    assert jnp.allclose(out, ref, atol=1e-4, rtol=1e-4), "mismatch vs reference"

    print("KERNEL_OK")
</pallas_src>

<mosaic_0001>
module attributes {stable_mosaic.version = 11 : i64} {
  func.func @_sepconv_kernel(%arg0: i32, %arg1: memref<1x4x456xf32, #tpu.memory_space<vmem>>, %arg2: memref<9x4x1xf32, #tpu.memory_space<vmem>>, %arg3: memref<4x8x1xf32, #tpu.memory_space<vmem>>, %arg4: memref<1x8x384xf32, #tpu.memory_space<vmem>>) attributes {dimension_semantics = [#tpu.dimension_semantics<parallel>], iteration_bounds = array<i64: 2>, scalar_prefetch = 0 : i64, scratch_operands = 0 : i64, tpu.core_type = #tpu.core_type<tc>, window_params = [{transform_indices = @transform_0, window_bounds = array<i64: 1, 4, 456>}, {pipeline_mode = #tpu.pipeline_mode<synchronous>, transform_indices = @transform_1, window_bounds = array<i64: 9, 4, 1>}, {pipeline_mode = #tpu.pipeline_mode<synchronous>, transform_indices = @transform_2, window_bounds = array<i64: 4, 8, 1>}, {transform_indices = @transform_3, window_bounds = array<i64: 1, 8, 384>}]} {
    %cst = arith.constant 0.000000e+00 : f32
    %0 = vector.broadcast %cst : f32 to vector<4x384xf32>
    %c0 = arith.constant 0 : index
    %c0_0 = arith.constant 0 : index
    %c0_1 = arith.constant 0 : index
    %1 = vector.load %arg1[%c0, %c0_0, %c0_1] : memref<1x4x456xf32, #tpu.memory_space<vmem>>, vector<1x4x384xf32>
    %2 = vector.shape_cast %1 : vector<1x4x384xf32> to vector<4x384xf32>
    %c0_2 = arith.constant 0 : index
    %c0_3 = arith.constant 0 : index
    %c0_4 = arith.constant 0 : index
    %3 = vector.load %arg2[%c0_2, %c0_3, %c0_4] : memref<9x4x1xf32, #tpu.memory_space<vmem>>, vector<1x4x1xf32>
    %4 = vector.shape_cast %3 : vector<1x4x1xf32> to vector<4x1xf32>
    %5 = vector.broadcast %4 : vector<4x1xf32> to vector<4x384xf32>
    %6 = arith.mulf %2, %5 : vector<4x384xf32>
    %7 = arith.addf %0, %6 : vector<4x384xf32>
    %c0_5 = arith.constant 0 : index
    %c0_6 = arith.constant 0 : index
    %c1 = arith.constant 1 : index
    %8 = vector.load %arg1[%c0_5, %c0_6, %c1] : memref<1x4x456xf32, #tpu.memory_space<vmem>>, vector<1x4x384xf32>
    %9 = vector.shape_cast %8 : vector<1x4x384xf32> to vector<4x384xf32>
    %c1_7 = arith.constant 1 : index
    %c0_8 = arith.constant 0 : index
    %c0_9 = arith.constant 0 : index
    %10 = vector.load %arg2[%c1_7, %c0_8, %c0_9] : memref<9x4x1xf32, #tpu.memory_space<vmem>>, vector<1x4x1xf32>
    %11 = vector.shape_cast %10 : vector<1x4x1xf32> to vector<4x1xf32>
    %12 = vector.broadcast %11 : vector<4x1xf32> to vector<4x384xf32>
    %13 = arith.mulf %9, %12 : vector<4x384xf32>
    %14 = arith.addf %7, %13 : vector<4x384xf32>
    %c0_10 = arith.constant 0 : index
    %c0_11 = arith.constant 0 : index
    %c2 = arith.constant 2 : index
    %15 = vector.load %arg1[%c0_10, %c0_11, %c2] : memref<1x4x456xf32, #tpu.memory_space<vmem>>, vector<1x4x384xf32>
    %16 = vector.shape_cast %15 : vector<1x4x384xf32> to vector<4x384xf32>
    %c2_12 = arith.constant 2 : index
    %c0_13 = arith.constant 0 : index
    %c0_14 = arith.constant 0 : index
    %17 = vector.load %arg2[%c2_12, %c0_13, %c0_14] : memref<9x4x1xf32, #tpu.memory_space<vmem>>, vector<1x4x1xf32>
    %18 = vector.shape_cast %17 : vector<1x4x1xf32> to vector<4x1xf32>
    %19 = vector.broadcast %18 : vector<4x1xf32> to vector<4x384xf32>
    %20 = arith.mulf %16, %19 : vector<4x384xf32>
    %21 = arith.addf %14, %20 : vector<4x384xf32>
    %c0_15 = arith.constant 0 : index
    %c0_16 = arith.constant 0 : index
    %c24 = arith.constant 24 : index
    %22 = vector.load %arg1[%c0_15, %c0_16, %c24] : memref<1x4x456xf32, #tpu.memory_space<vmem>>, vector<1x4x384xf32>
    %23 = vector.shape_cast %22 : vector<1x4x384xf32> to vector<4x384xf32>
    %c3 = arith.constant 3 : index
    %c0_17 = arith.constant 0 : index
    %c0_18 = arith.constant 0 : index
    %24 = vector.load %arg2[%c3, %c0_17, %c0_18] : memref<9x4x1xf32, #tpu.memory_space<vmem>>, vector<1x4x1xf32>
    %25 = vector.shape_cast %24 : vector<1x4x1xf32> to vector<4x1xf32>
    %26 = vector.broadcast %25 : vector<4x1xf32> to vector<4x384xf32>
    %27 = arith.mulf %23, %26 : vector<4x384xf32>
    %28 = arith.addf %21, %27 : vector<4x384xf32>
    %c0_19 = arith.constant 0 : index
    %c0_20 = arith.constant 0 : index
    %c25 = arith.constant 25 : index
    %29 = vector.load %arg1[%c0_19, %c0_20, %c25] : memref<1x4x456xf32, #tpu.memory_space<vmem>>, vector<1x4x384xf32>
    %30 = vector.shape_cast %29 : vector<1x4x384xf32> to vector<4x384xf32>
    %c4 = arith.constant 4 : index
    %c0_21 = arith.constant 0 : index
    %c0_22 = arith.constant 0 : index
    %31 = vector.load %arg2[%c4, %c0_21, %c0_22] : memref<9x4x1xf32, #tpu.memory_space<vmem>>, vector<1x4x1xf32>
    %32 = vector.shape_cast %31 : vector<1x4x1xf32> to vector<4x1xf32>
    %33 = vector.broadcast %32 : vector<4x1xf32> to vector<4x384xf32>
    %34 = arith.mulf %30, %33 : vector<4x384xf32>
    %35 = arith.addf %28, %34 : vector<4x384xf32>
    %c0_23 = arith.constant 0 : index
    %c0_24 = arith.constant 0 : index
    %c26 = arith.constant 26 : index
    %36 = vector.load %arg1[%c0_23, %c0_24, %c26] : memref<1x4x456xf32, #tpu.memory_space<vmem>>, vector<1x4x384xf32>
    %37 = vector.shape_cast %36 : vector<1x4x384xf32> to vector<4x384xf32>
    %c5 = arith.constant 5 : index
    %c0_25 = arith.constant 0 : index
    %c0_26 = arith.constant 0 : index
    %38 = vector.load %arg2[%c5, %c0_25, %c0_26] : memref<9x4x1xf32, #tpu.memory_space<vmem>>, vector<1x4x1xf32>
    %39 = vector.shape_cast %38 : vector<1x4x1xf32> to vector<4x1xf32>
    %40 = vector.broadcast %39 : vector<4x1xf32> to vector<4x384xf32>
    %41 = arith.mulf %37, %40 : vector<4x384xf32>
    %42 = arith.addf %35, %41 : vector<4x384xf32>
    %c0_27 = arith.constant 0 : index
    %c0_28 = arith.constant 0 : index
    %c48 = arith.constant 48 : index
    %43 = vector.load %arg1[%c0_27, %c0_28, %c48] : memref<1x4x456xf32, #tpu.memory_space<vmem>>, vector<1x4x384xf32>
    %44 = vector.shape_cast %43 : vector<1x4x384xf32> to vector<4x384xf32>
    %c6 = arith.constant 6 : index
    %c0_29 = arith.constant 0 : index
    %c0_30 = arith.constant 0 : index
    %45 = vector.load %arg2[%c6, %c0_29, %c0_30] : memref<9x4x1xf32, #tpu.memory_space<vmem>>, vector<1x4x1xf32>
    %46 = vector.shape_cast %45 : vector<1x4x1xf32> to vector<4x1xf32>
    %47 = vector.broadcast %46 : vector<4x1xf32> to vector<4x384xf32>
    %48 = arith.mulf %44, %47 : vector<4x384xf32>
    %49 = arith.addf %42, %48 : vector<4x384xf32>
    %c0_31 = arith.constant 0 : index
    %c0_32 = arith.constant 0 : index
    %c49 = arith.constant 49 : index
    %50 = vector.load %arg1[%c0_31, %c0_32, %c49] : memref<1x4x456xf32, #tpu.memory_space<vmem>>, vector<1x4x384xf32>
    %51 = vector.shape_cast %50 : vector<1x4x384xf32> to vector<4x384xf32>
    %c7 = arith.constant 7 : index
    %c0_33 = arith.constant 0 : index
    %c0_34 = arith.constant 0 : index
    %52 = vector.load %arg2[%c7, %c0_33, %c0_34] : memref<9x4x1xf32, #tpu.memory_space<vmem>>, vector<1x4x1xf32>
    %53 = vector.shape_cast %52 : vector<1x4x1xf32> to vector<4x1xf32>
    %54 = vector.broadcast %53 : vector<4x1xf32> to vector<4x384xf32>
    %55 = arith.mulf %51, %54 : vector<4x384xf32>
    %56 = arith.addf %49, %55 : vector<4x384xf32>
    %c0_35 = arith.constant 0 : index
    %c0_36 = arith.constant 0 : index
    %c50 = arith.constant 50 : index
    %57 = vector.load %arg1[%c0_35, %c0_36, %c50] : memref<1x4x456xf32, #tpu.memory_space<vmem>>, vector<1x4x384xf32>
    %58 = vector.shape_cast %57 : vector<1x4x384xf32> to vector<4x384xf32>
    %c8 = arith.constant 8 : index
    %c0_37 = arith.constant 0 : index
    %c0_38 = arith.constant 0 : index
    %59 = vector.load %arg2[%c8, %c0_37, %c0_38] : memref<9x4x1xf32, #tpu.memory_space<vmem>>, vector<1x4x1xf32>
    %60 = vector.shape_cast %59 : vector<1x4x1xf32> to vector<4x1xf32>
    %61 = vector.broadcast %60 : vector<4x1xf32> to vector<4x384xf32>
    %62 = arith.mulf %58, %61 : vector<4x384xf32>
    %63 = arith.addf %56, %62 : vector<4x384xf32>
    %cst_39 = arith.constant 0.000000e+00 : f32
    %64 = vector.broadcast %cst_39 : f32 to vector<8x384xf32>
    %65 = vector.extract_strided_slice %63 {offsets = [0, 0], sizes = [1, 384], strides = [1, 1]} : vector<4x384xf32> to vector<1x384xf32>
    %c0_40 = arith.constant 0 : index
    %c0_41 = arith.constant 0 : index
    %c0_42 = arith.constant 0 : index
    %66 = vector.load %arg3[%c0_40, %c0_41, %c0_42] : memref<4x8x1xf32, #tpu.memory_space<vmem>>, vector<1x8x1xf32>
    %67 = vector.shape_cast %66 : vector<1x8x1xf32> to vector<8x1xf32>
    %68 = vector.broadcast %65 : vector<1x384xf32> to vector<8x384xf32>
    %69 = vector.broadcast %67 : vector<8x1xf32> to vector<8x384xf32>
    %70 = arith.mulf %68, %69 : vector<8x384xf32>
    %71 = arith.addf %64, %70 : vector<8x384xf32>
    %72 = vector.extract_strided_slice %63 {offsets = [1, 0], sizes = [1, 384], strides = [1, 1]} : vector<4x384xf32> to vector<1x384xf32>
    %c1_43 = arith.constant 1 : index
    %c0_44 = arith.constant 0 : index
    %c0_45 = arith.constant 0 : index
    %73 = vector.load %arg3[%c1_43, %c0_44, %c0_45] : memref<4x8x1xf32, #tpu.memory_space<vmem>>, vector<1x8x1xf32>
    %74 = vector.shape_cast %73 : vector<1x8x1xf32> to vector<8x1xf32>
    %75 = vector.broadcast %72 : vector<1x384xf32> to vector<8x384xf32>
    %76 = vector.broadcast %74 : vector<8x1xf32> to vector<8x384xf32>
    %77 = arith.mulf %75, %76 : vector<8x384xf32>
    %78 = arith.addf %71, %77 : vector<8x384xf32>
    %79 = vector.extract_strided_slice %63 {offsets = [2, 0], sizes = [1, 384], strides = [1, 1]} : vector<4x384xf32> to vector<1x384xf32>
    %c2_46 = arith.constant 2 : index
    %c0_47 = arith.constant 0 : index
    %c0_48 = arith.constant 0 : index
    %80 = vector.load %arg3[%c2_46, %c0_47, %c0_48] : memref<4x8x1xf32, #tpu.memory_space<vmem>>, vector<1x8x1xf32>
    %81 = vector.shape_cast %80 : vector<1x8x1xf32> to vector<8x1xf32>
    %82 = vector.broadcast %79 : vector<1x384xf32> to vector<8x384xf32>
    %83 = vector.broadcast %81 : vector<8x1xf32> to vector<8x384xf32>
    %84 = arith.mulf %82, %83 : vector<8x384xf32>
    %85 = arith.addf %78, %84 : vector<8x384xf32>
    %86 = vector.extract_strided_slice %63 {offsets = [3, 0], sizes = [1, 384], strides = [1, 1]} : vector<4x384xf32> to vector<1x384xf32>
    %c3_49 = arith.constant 3 : index
    %c0_50 = arith.constant 0 : index
    %c0_51 = arith.constant 0 : index
    %87 = vector.load %arg3[%c3_49, %c0_50, %c0_51] : memref<4x8x1xf32, #tpu.memory_space<vmem>>, vector<1x8x1xf32>
    %88 = vector.shape_cast %87 : vector<1x8x1xf32> to vector<8x1xf32>
    %89 = vector.broadcast %86 : vector<1x384xf32> to vector<8x384xf32>
    %90 = vector.broadcast %88 : vector<8x1xf32> to vector<8x384xf32>
    %91 = arith.mulf %89, %90 : vector<8x384xf32>
    %92 = arith.addf %85, %91 : vector<8x384xf32>
    %c0_52 = arith.constant 0 : index
    %c0_53 = arith.constant 0 : index
    %c0_54 = arith.constant 0 : index
    %93 = vector.load %arg4[%c0_52, %c0_53, %c0_54] : memref<1x8x384xf32, #tpu.memory_space<vmem>>, vector<1x8x384xf32>
    %94 = vector.shape_cast %93 : vector<1x8x384xf32> to vector<8x384xf32>
    %95 = vector.shape_cast %92 : vector<8x384xf32> to vector<1x8x384xf32>
    tpu.vector_store %arg4[%c0_52, %c0_53, %c0_54], %95 {strides = array<i32>} : memref<1x8x384xf32, #tpu.memory_space<vmem>>, vector<1x8x384xf32>,
    return
  }
  func.func @transform_0(%arg0: i32) -> (i32, i32, i32) {
    %c0_i32 = arith.constant 0 : i32
    %c0_i32_0 = arith.constant 0 : i32
    %c0_i32_1 = arith.constant 0 : i32
    return %arg0, %c0_i32, %c0_i32_0 : i32, i32, i32
  }
  func.func @transform_1(%arg0: i32) -> (i32, i32, i32) {
    %c0_i32 = arith.constant 0 : i32
    %c0_i32_0 = arith.constant 0 : i32
    %c0_i32_1 = arith.constant 0 : i32
    %c0_i32_2 = arith.constant 0 : i32
    return %c0_i32, %c0_i32_0, %c0_i32_1 : i32, i32, i32
  }
  func.func @transform_2(%arg0: i32) -> (i32, i32, i32) {
    %c0_i32 = arith.constant 0 : i32
    %c0_i32_0 = arith.constant 0 : i32
    %c0_i32_1 = arith.constant 0 : i32
    %c0_i32_2 = arith.constant 0 : i32
    return %c0_i32, %c0_i32_0, %c0_i32_1 : i32, i32, i32
  }
  func.func @transform_3(%arg0: i32) -> (i32, i32, i32) {
    %c0_i32 = arith.constant 0 : i32
    %c0_i32_0 = arith.constant 0 : i32
    %c0_i32_1 = arith.constant 0 : i32
    return %arg0, %c0_i32, %c0_i32_0 : i32, i32, i32
  }
}

</mosaic_0001>

<llo_original>
// kernel: tpu_custom_call.1
$region0: #{tpu_custom_call.1}
  #allocation0 [shape = 'u32[]', space=smem, size = 0x4, offset = 0x4, fixed_abs, tag = 'smem constant byte address 0x4 - core index']
  #allocation1 [shape = 'u32[144,128]{1,0:T(1,128)}', space=vmem, size = 0x12000, scoped, tag = 'internal scratch']
  %s0 = inlined_call_operand.vmem [shape: f32[2,4,456], index: 0, kind: input, shape index: {}]
  %s1 = inlined_call_operand.vmem [shape: f32[9,4,1], index: 1, kind: input, shape index: {}]
  %s2 = inlined_call_operand.vmem [shape: f32[4,8,1], index: 2, kind: input, shape index: {}]
  %s3 = inlined_call_operand.hbm [shape: f32[2,8,384], index: 3, kind: output, shape index: {}]
  %s4 = sld [smem:[#allocation0]]
  $region45: #{tpu_custom_call.1} parent=0
    _
  %s6 = ssub.s32 1, %s4
  %s7 = scalar_select 0, %s6, %s4
  $region1: #{tpu_custom_call.1} parent=0
    #allocation2 [shape = 'u8[24576]{0}', space=vmem, size = 0x6000, scoped, tag = 'output window, operand 0']
    #allocation3 [shape = 's32[2]{0}', space=sflag, size = 0x8, scoped, tag = 'scoped memory for tpu_custom_call.1']
    %8 = vsyncpa [#allocation3], 0
    %s9 = scalar_lea.sflag [#allocation3], 1
    %10 = vsyncpa %s9, 0
    loop: start=0, step=1, limit=4
    $region2: #{tpu_custom_call.1} parent=1 // loop_pre_header
      _
    $region3: #{tpu_custom_call.1} parent=1 // loop_header
      %s12 = sphi 0, %s16
      %p13 = scmp.ge.s32.totalorder %s12, 4
      %s22 = sphi 0, %s24
      %s25 = sphi 0, %s22
      %s26 = sphi 0, %s25
      %s42 = sphi 0, %s26
      %s46 = sphi 0, %s46
      %s48 = sphi 0, %s46
      %s49 = sphi 0, %s48
      %s63 = sphi 0, %s49
      %s67 = sphi 0, %s67
      %s69 = sphi 0, %s67
      %s70 = sphi 0, %s69
      %s84 = sphi 0, %s70
      %s90 = sphi 0, %s92
      %s93 = sphi 0, %s90
      %s94 = sphi 0, %s93
      %s110 = sphi 0, %s94
    $region4: #{tpu_custom_call.1} parent=1 // loop_header_branch
      %15 = sbr.rel (%p13) target = $region8
    $region5: #{tpu_custom_call.1} parent=1 // loop_body
      %s17 = ssub.s32 %s12, 1
      %s18 = ssub.s32 %s12, 2
      %s19 = sadd.s32 %s12, 1
      %s20 = ssub.s32 %s12, %s19
      %p21 = scmp.eq.s32.totalorder %s20, 0
      %s23 = sadd.s32 %s22, 1
      %s24 = scalar_select %p21, %s22, %s23
      %p27 = pneg %p21
      %p28 = scmp.eq.s32.totalorder %s12, 1
      %p29 = por %p27, %p28
      %p30 = scmp.ne.s32.totalorder %s22, %s25
      %p31 = scmp.eq.s32.totalorder %s12, 0
      %p32 = por %p30, %p31
      %p33 = scmp.ne.s32.totalorder %s22, %s25
      %p34 = scmp.eq.s32.totalorder %s17, 1
      %p35 = por %p33, %p34
      %p36 = scmp.ne.s32.totalorder %s25, %s26
      %p37 = scmp.eq.s32.totalorder %s17, 0
      %p38 = por %p36, %p37
      %p39 = scmp.ne.s32.totalorder %s25, %s26
      %p40 = scmp.eq.s32.totalorder %s18, 1
      %p41 = por %p39, %p40
      %p43 = scmp.ne.s32.totalorder %s26, %s42
      %p44 = scmp.eq.s32.totalorder %s18, 0
      %p45 = por %p43, %p44
      %s47 = sadd.s32 %s46, 1
      %p50 = scmp.eq.s32.totalorder %s12, 1
      %p51 = scmp.ne.s32.totalorder %s46, %s48
      %p52 = scmp.eq.s32.totalorder %s12, 0
      %p53 = por %p51, %p52
      %p54 = scmp.ne.s32.totalorder %s46, %s48
      %p55 = scmp.eq.s32.totalorder %s17, 1
      %p56 = por %p54, %p55
      %p57 = scmp.ne.s32.totalorder %s48, %s49
      %p58 = scmp.eq.s32.totalorder %s17, 0
      %p59 = por %p57, %p58
      %p60 = scmp.ne.s32.totalorder %s48, %s49
      %p61 = scmp.eq.s32.totalorder %s18, 1
      %p62 = por %p60, %p61
      %p64 = scmp.ne.s32.totalorder %s49, %s63
      %p65 = scmp.eq.s32.totalorder %s18, 0
      %p66 = por %p64, %p65
      %s68 = sadd.s32 %s67, 1
      %p71 = scmp.eq.s32.totalorder %s12, 1
      %p72 = scmp.ne.s32.totalorder %s67, %s69
      %p73 = scmp.eq.s32.totalorder %s12, 0
      %p74 = por %p72, %p73
      %p75 = scmp.ne.s32.totalorder %s67, %s69
      %p76 = scmp.eq.s32.totalorder %s17, 1
      %p77 = por %p75, %p76
      %p78 = scmp.ne.s32.totalorder %s69, %s70
      %p79 = scmp.eq.s32.totalorder %s17, 0
      %p80 = por %p78, %p79
      %p81 = scmp.ne.s32.totalorder %s69, %s70
      %p82 = scmp.eq.s32.totalorder %s18, 1
      %p83 = por %p81, %p82
      %p85 = scmp.ne.s32.totalorder %s70, %s84
      %p86 = scmp.eq.s32.totalorder %s18, 0
      %p87 = por %p85, %p86
      %s88 = ssub.s32 %s12, %s19
      %p89 = scmp.eq.s32.totalorder %s88, 0
      %s91 = sadd.s32 %s90, 1
      %s92 = scalar_select %p89, %s90, %s91
      %p95 = pneg %p89
      %p96 = scmp.eq.s32.totalorder %s12, 1
      %p97 = por %p95, %p96
      %p98 = scmp.ne.s32.totalorder %s90, %s93
      %p99 = scmp.eq.s32.totalorder %s12, 0
      %p100 = por %p98, %p99
      %p101 = scmp.ne.s32.totalorder %s90, %s93
      %p102 = scmp.eq.s32.totalorder %s17, 1
      %p103 = por %p101, %p102
      %p104 = scmp.ne.s32.totalorder %s93, %s94
      %p105 = scmp.eq.s32.totalorder %s17, 0
      %p106 = por %p104, %p105
      %p107 = scmp.ne.s32.totalorder %s93, %s94
      %p108 = scmp.eq.s32.totalorder %s18, 1
      %p109 = por %p107, %p108
      %p111 = scmp.ne.s32.totalorder %s94, %s110
      %p112 = scmp.eq.s32.totalorder %s18, 0
      %p113 = por %p111, %p112
      %p114 = scmp.le.s32.totalorder 1, %s12
      %p115 = scmp.lt.s32.totalorder %s12, 3
      %p116 = pnand %p114, %p115
      %p117 = pneg %p116
      // Predicated region
      $region9: #{tpu_custom_call.1} parent=5 // pred_check
        _
      $region10: #{tpu_custom_call.1} parent=5 // pred_check_branch
        %119 = sbr.rel (%p116) target = $region12
      $region11: #{tpu_custom_call.1} parent=5 // pred_region
        %s120 = ssub.s32 %s12, 1
        // Predicated region
        $region13: #{tpu_custom_call.1} parent=11 // pred_check
          %p121 = pneg %p59
        $region14: #{tpu_custom_call.1} parent=11 // pred_check_branch
          %123 = sbr.rel (%p121) target = $region16
        $region15: #{tpu_custom_call.1} parent=11 // pred_region
          _
        $region16: #{tpu_custom_call.1} parent=11 // pred_fallthru
          _
        // Predicated region
        $region17: #{tpu_custom_call.1} parent=11 // pred_check
          %p124 = pneg %p80
        $region18: #{tpu_custom_call.1} parent=11 // pred_check_branch
          %126 = sbr.rel (%p124) target = $region20
        $region19: #{tpu_custom_call.1} parent=11 // pred_region
          _
        $region20: #{tpu_custom_call.1} parent=11 // pred_fallthru
          _
      $region12: #{tpu_custom_call.1} parent=5 // pred_fallthru
        _
      %p127 = scmp.lt.s32.totalorder %s12, 2
      // Predicated region
      $region21: #{tpu_custom_call.1} parent=5 // pred_check
        %p128 = pneg %p127
      $region22: #{tpu_custom_call.1} parent=5 // pred_check_branch
        %130 = sbr.rel (%p128) target = $region24
      $region23: #{tpu_custom_call.1} parent=5 // pred_region
        // Predicated region
        $region25: #{tpu_custom_call.1} parent=23 // pred_check
          %p131 = pneg %p32
        $region26: #{tpu_custom_call.1} parent=23 // pred_check_branch
          %133 = sbr.rel (%p131) target = $region28
        $region27: #{tpu_custom_call.1} parent=23 // pred_region
          %p134 = scmp.lt.s32.totalorder %s12, 1
          %s135 = scalar_select %p134, %s12, 1
          %s136 = smul.addr %s135, 4
          %s137 = smul.addr %s136, 4
          %s138 = scalar_lea.vmem %s0, %s137
        $region28: #{tpu_custom_call.1} parent=23 // pred_fallthru
          _
      $region24: #{tpu_custom_call.1} parent=5 // pred_fallthru
        _
      %p139 = scmp.le.s32.totalorder 1, %s12
      %p140 = scmp.lt.s32.totalorder %s12, 3
      %p141 = pnand %p139, %p140
      %p142 = pneg %p141
      // Predicated region
      $region29: #{tpu_custom_call.1} parent=5 // pred_check
        _
      $region30: #{tpu_custom_call.1} parent=5 // pred_check_branch
        %144 = sbr.rel (%p141) target = $region32
      $region31: #{tpu_custom_call.1} parent=5 // pred_region
        %s145 = ssub.s32 %s12, 1
        %p146 = scmp.lt.s32.totalorder %s17, 1
        %s147 = scalar_select %p146, %s17, 1
        %s148 = smul.addr %s147, 4
        %s149 = smul.addr %s148, 4
        %s150 = scalar_lea.vmem %s0, %s149
        %p151 = pneg %p38
        %p152 = pneg %p35
        %p153 = pneg %p59
        %p154 = pneg %p56
        %p155 = pneg %p80
        %p156 = pneg %p77
        %p157 = pneg %p106
        %p158 = pneg %p103
        %s159 = sand.u32 %s93, 1
        %s160 = scalar_lea.sflag [#allocation3], %s159
        %s161 = sand.u32 %s93, 1
        %s162 = smul.addr %s161, 24
        %s163 = scalar_lea.vmem [#allocation2], %s162
        %p164 = scmp.lt.s32.totalorder %s17, 1
        %s165 = scalar_select %p164, %s17, 1
        %s166 = smul.addr %s165, 4
        %s167 = smul.addr %s166, 4
        %s168 = scalar_lea.vmem %s0, %s167
        %v169 = vld [vmem:[%s168] sm:$0xff]
        %v170 = vld [vmem:[%s168 + $0x8] sm:$0xf]
        %v171 = vld [vmem:[%s1] sm:$0xf]
        %173 = vset.pattern.permute.xlu0 0
        %174 = vperm.xlu0 %173, %v171
        %v175 = vpop.permute.xlu0 %174
        %v177 = vunpack.c.l.s4 839922192
        %v178 = vunpack.c.0.s8 %v177
        %v179 = vlaneseq
        %v180 = vshrl.u32 %v179, 7
        %v181 = vsub.s32 %v178, %v180
        %v182 = vrot.slane %v175, %v181
        %v184 = vmul.f32 %v169, %v182
        %v185 = vmul.f32 %v170, %v182
        %v186 = vadd.f32 %v184, 0.0
        %v187 = vadd.f32 %v185, 0.0
        %v188 = vld [vmem:[%s168] sm:$0xff]
        %v189 = vld [vmem:[%s168 + $0x8] sm:$0xff]
        %s190 = scalar_lea.vmem %s1, 4
        %v191 = vld [vmem:[%s190] sm:$0xf]
        %193 = vset.pattern.permute.xlu0 0
        %194 = vperm.xlu0 %193, %v191
        %v195 = vpop.permute.xlu0 %194
        %v197 = vunpack.c.l.s4 839922192
        %v198 = vunpack.c.0.s8 %v197
        %v199 = vlaneseq
        %v200 = vshrl.u32 %v199, 7
        %v201 = vsub.s32 %v198, %v200
        %v202 = vrot.slane %v195, %v201
        %v204 = vmul.f32 %v188, %v202
        %v205 = vmul.f32 %v189, %v202
        %208 = vrot.lane.b32.xlu0 %v204, 127
        %v209 = vpop.permute.xlu0 %208
        %210 = vrot.lane.b32.xlu0 %v205, 127
        %v211 = vpop.permute.xlu0 %210
        %v212 = vrot.slane %v209, 4
        %v213 = vrot.slane %v211, 4
        %vm214 = vcmask 1043456
        %v215 = vsel %vm214, %v212, %v213
        %vm216 = vcmask 1039360
        %v217 = vsel %vm216, %v209, %v215
        %v218 = vsel %vm216, %v211, %v213
        %v221 = vadd.f32 %v186, %v217
        %v222 = vadd.f32 %v187, %v218
        %s223 = scalar_lea.vmem %s1, 8
        %v224 = vld [vmem:[%s223] sm:$0xf]
        %226 = vset.pattern.permute.xlu0 0
        %227 = vperm.xlu0 %226, %v224
        %v228 = vpop.permute.xlu0 %227
        %v230 = vunpack.c.l.s4 839922192
        %v231 = vunpack.c.0.s8 %v230
        %v232 = vlaneseq
        %v233 = vshrl.u32 %v232, 7
        %v234 = vsub.s32 %v231, %v233
        %v235 = vrot.slane %v228, %v234
        %v237 = vmul.f32 %v188, %v235
        %v238 = vmul.f32 %v189, %v235
        %241 = vrot.lane.b32.xlu0 %v237, 126
        %v242 = vpop.permute.xlu0 %241
        %243 = vrot.lane.b32.xlu0 %v238, 126
        %v244 = vpop.permute.xlu0 %243
        %v245 = vrot.slane %v242, 4
        %v246 = vrot.slane %v244, 4
        %v247 = vsel %vm214, %v245, %v246
        %vm248 = vcmask 1031168
        %v249 = vsel %vm248, %v242, %v247
        %v250 = vsel %vm248, %v244, %v246
        %v253 = vadd.f32 %v221, %v249
        %v254 = vadd.f32 %v222, %v250
        %s255 = scalar_lea.vmem %s1, 12
        %v256 = vld [vmem:[%s255] sm:$0xf]
        %258 = vset.pattern.permute.xlu0 0
        %259 = vperm.xlu0 %258, %v256
        %v260 = vpop.permute.xlu0 %259
        %v262 = vunpack.c.l.s4 839922192
        %v263 = vunpack.c.0.s8 %v262
        %v264 = vlaneseq
        %v265 = vshrl.u32 %v264, 7
        %v266 = vsub.s32 %v263, %v265
        %v267 = vrot.slane %v260, %v266
        %v269 = vmul.f32 %v188, %v267
        %v270 = vmul.f32 %v189, %v267
        %273 = vrot.lane.b32.xlu0 %v269, 104
        %v274 = vpop.permute.xlu0 %273
        %275 = vrot.lane.b32.xlu0 %v270, 104
        %v276 = vpop.permute.xlu0 %275
        %v277 = vrot.slane %v274, 4
        %v278 = vrot.slane %v276, 4
        %v279 = vsel %vm214, %v277, %v278
        %vm280 = vcmask 850944
        %v281 = vsel %vm280, %v274, %v279
        %v282 = vsel %vm280, %v276, %v278
        %v285 = vadd.f32 %v253, %v281
        %v286 = vadd.f32 %v254, %v282
        %s287 = scalar_lea.vmem %s1, 16
        %v288 = vld [vmem:[%s287] sm:$0xf]
        %290 = vset.pattern.permute.xlu0 0
        %291 = vperm.xlu0 %290, %v288
        %v292 = vpop.permute.xlu0 %291
        %v294 = vunpack.c.l.s4 839922192
        %v295 = vunpack.c.0.s8 %v294
        %v296 = vlaneseq
        %v297 = vshrl.u32 %v296, 7
        %v298 = vsub.s32 %v295, %v297
        %v299 = vrot.slane %v292, %v298
        %v301 = vmul.f32 %v188, %v299
        %v302 = vmul.f32 %v189, %v299
        %305 = vrot.lane.b32.xlu0 %v301, 103
        %v306 = vpop.permute.xlu0 %305
        %307 = vrot.lane.b32.xlu0 %v302, 103
        %v308 = vpop.permute.xlu0 %307
        %v309 = vrot.slane %v306, 4
        %v310 = vrot.slane %v308, 4
        %v311 = vsel %vm214, %v309, %v310
        %vm312 = vcmask 842752
        %v313 = vsel %vm312, %v306, %v311
        %v314 = vsel %vm312, %v308, %v310
        %v317 = vadd.f32 %v285, %v313
        %v318 = vadd.f32 %v286, %v314
        %s319 = scalar_lea.vmem %s1, 20
        %v320 = vld [vmem:[%s319] sm:$0xf]
        %322 = vset.pattern.permute.xlu0 0
        %323 = vperm.xlu0 %322, %v320
        %v324 = vpop.permute.xlu0 %323
        %v326 = vunpack.c.l.s4 839922192
        %v327 = vunpack.c.0.s8 %v326
        %v328 = vlaneseq
        %v329 = vshrl.u32 %v328, 7
        %v330 = vsub.s32 %v327, %v329
        %v331 = vrot.slane %v324, %v330
        %v333 = vmul.f32 %v188, %v331
        %v334 = vmul.f32 %v189, %v331
        %337 = vrot.lane.b32.xlu0 %v333, 102
        %v338 = vpop.permute.xlu0 %337
        %339 = vrot.lane.b32.xlu0 %v334, 102
        %v340 = vpop.permute.xlu0 %339
        %v341 = vrot.slane %v338, 4
        %v342 = vrot.slane %v340, 4
        %v343 = vsel %vm214, %v341, %v342
        %vm344 = vcmask 834560
        %v345 = vsel %vm344, %v338, %v343
        %v346 = vsel %vm344, %v340, %v342
        %v349 = vadd.f32 %v317, %v345
        %v350 = vadd.f32 %v318, %v346
        %s351 = scalar_lea.vmem %s1, 24
        %v352 = vld [vmem:[%s351] sm:$0xf]
        %354 = vset.pattern.permute.xlu0 0
        %355 = vperm.xlu0 %354, %v352
        %v356 = vpop.permute.xlu0 %355
        %v358 = vunpack.c.l.s4 839922192
        %v359 = vunpack.c.0.s8 %v358
        %v360 = vlaneseq
        %v361 = vshrl.u32 %v360, 7
        %v362 = vsub.s32 %v359, %v361
        %v363 = vrot.slane %v356, %v362
        %v365 = vmul.f32 %v188, %v363
        %v366 = vmul.f32 %v189, %v363
        %369 = vrot.lane.b32.xlu0 %v365, 80
        %v370 = vpop.permute.xlu0 %369
        %371 = vrot.lane.b32.xlu0 %v366, 80
        %v372 = vpop.permute.xlu0 %371
        %v373 = vrot.slane %v370, 4
        %v374 = vrot.slane %v372, 4
        %v375 = vsel %vm214, %v373, %v374
        %vm376 = vcmask 654336
        %v377 = vsel %vm376, %v370, %v375
        %v378 = vsel %vm376, %v372, %v374
        %v381 = vadd.f32 %v349, %v377
        %v382 = vadd.f32 %v350, %v378
        %s383 = scalar_lea.vmem %s1, 28
        %v384 = vld [vmem:[%s383] sm:$0xf]
        %386 = vset.pattern.permute.xlu0 0
        %387 = vperm.xlu0 %386, %v384
        %v388 = vpop.permute.xlu0 %387
        %v390 = vunpack.c.l.s4 839922192
        %v391 = vunpack.c.0.s8 %v390
        %v392 = vlaneseq
        %v393 = vshrl.u32 %v392, 7
        %v394 = vsub.s32 %v391, %v393
        %v395 = vrot.slane %v388, %v394
        %v397 = vmul.f32 %v188, %v395
        %v398 = vmul.f32 %v189, %v395
        %401 = vrot.lane.b32.xlu0 %v397, 79
        %v402 = vpop.permute.xlu0 %401
        %403 = vrot.lane.b32.xlu0 %v398, 79
        %v404 = vpop.permute.xlu0 %403
        %v405 = vrot.slane %v402, 4
        %v406 = vrot.slane %v404, 4
        %v407 = vsel %vm214, %v405, %v406
        %vm408 = vcmask 646144
        %v409 = vsel %vm408, %v402, %v407
        %v410 = vsel %vm408, %v404, %v406
        %v413 = vadd.f32 %v381, %v409
        %v414 = vadd.f32 %v382, %v410
        %s415 = scalar_lea.vmem %s1, 32
        %v416 = vld [vmem:[%s415] sm:$0xf]
        %418 = vset.pattern.permute.xlu0 0
        %419 = vperm.xlu0 %418, %v416
        %v420 = vpop.permute.xlu0 %419
        %v422 = vunpack.c.l.s4 839922192
        %v423 = vunpack.c.0.s8 %v422
        %v424 = vlaneseq
        %v425 = vshrl.u32 %v424, 7
        %v426 = vsub.s32 %v423, %v425
        %v427 = vrot.slane %v420, %v426
        %v429 = vmul.f32 %v188, %v427
        %v430 = vmul.f32 %v189, %v427
        %433 = vrot.lane.b32.xlu0 %v429, 78
        %v434 = vpop.permute.xlu0 %433
        %435 = vrot.lane.b32.xlu0 %v430, 78
        %v436 = vpop.permute.xlu0 %435
        %v437 = vrot.slane %v434, 4
        %v438 = vrot.slane %v436, 4
        %v439 = vsel %vm214, %v437, %v438
        %vm440 = vcmask 637952
        %v441 = vsel %vm440, %v434, %v439
        %v442 = vsel %vm440, %v436, %v438
        %v445 = vadd.f32 %v413, %v441
        %v446 = vadd.f32 %v414, %v442
        %v447 = vld [vmem:[%s2] sm:$0xff]
        %v450 = vlaneseq
        %v451 = vshrl.u32 %v450, 7
        %v452 = vsub.s32 0, %v451
        %v453 = vrot.slane %v445, %v452
        %v454 = vlaneseq
        %v455 = vshrl.u32 %v454, 7
        %v456 = vsub.s32 4, %v455
        %v457 = vrot.slane %v445, %v456
        %v458 = vlaneseq
        %v459 = vshrl.u32 %v458, 7
        %v460 = vsub.s32 0, %v459
        %v461 = vrot.slane %v446, %v460
        %v465 = vlaneseq
        %v466 = vshrl.u32 %v465, 7
        %v467 = vsub.s32 0, %v466
        %v468 = vrot.slane %v453, %v467
        %v469 = vlaneseq
        %v470 = vshrl.u32 %v469, 7
        %v471 = vsub.s32 0, %v470
        %v472 = vrot.slane %v457, %v471
        %v473 = vlaneseq
        %v474 = vshrl.u32 %v473, 7
        %v475 = vsub.s32 0, %v474
        %v476 = vrot.slane %v461, %v475
        %478 = vset.pattern.permute.xlu0 0
        %479 = vperm.xlu0 %478, %v447
        %v480 = vpop.permute.xlu0 %479
        %v482 = vmul.f32 %v468, %v480
        %v483 = vmul.f32 %v472, %v480
        %v484 = vmul.f32 %v476, %v480
        %v485 = vadd.f32 %v482, 0.0
        %v486 = vadd.f32 %v483, 0.0
        %v487 = vadd.f32 %v484, 0.0
        %s488 = scalar_lea.vmem %s2, 8
        %v489 = vld [vmem:[%s488] sm:$0xff]
        %v490 = vlaneseq
        %v491 = vshrl.u32 %v490, 7
        %v492 = vsub.s32 1, %v491
        %v493 = vrot.slane %v445, %v492
        %v494 = vlaneseq
        %v495 = vshrl.u32 %v494, 7
        %v496 = vsub.s32 5, %v495
        %v497 = vrot.slane %v445, %v496
        %v498 = vlaneseq
        %v499 = vshrl.u32 %v498, 7
        %v500 = vsub.s32 1, %v499
        %v501 = vrot.slane %v446, %v500
        %v505 = vlaneseq
        %v506 = vshrl.u32 %v505, 7
        %v507 = vsub.s32 1, %v506
        %v508 = vrot.slane %v493, %v507
        %v509 = vlaneseq
        %v510 = vshrl.u32 %v509, 7
        %v511 = vsub.s32 1, %v510
        %v512 = vrot.slane %v497, %v511
        %v513 = vlaneseq
        %v514 = vshrl.u32 %v513, 7
        %v515 = vsub.s32 1, %v514
        %v516 = vrot.slane %v501, %v515
        %518 = vset.pattern.permute.xlu0 0
        %519 = vperm.xlu0 %518, %v489
        %v520 = vpop.permute.xlu0 %519
        %v522 = vmul.f32 %v508, %v520
        %v523 = vmul.f32 %v512, %v520
        %v524 = vmul.f32 %v516, %v520
        %v525 = vadd.f32 %v485, %v522
        %v526 = vadd.f32 %v486, %v523
        %v527 = vadd.f32 %v487, %v524
        %s528 = scalar_lea.vmem %s2, 16
        %v529 = vld [vmem:[%s528] sm:$0xff]
        %v530 = vlaneseq
        %v531 = vshrl.u32 %v530, 7
        %v532 = vsub.s32 2, %v531
        %v533 = vrot.slane %v445, %v532
        %v534 = vlaneseq
        %v535 = vshrl.u32 %v534, 7
        %v536 = vsub.s32 6, %v535
        %v537 = vrot.slane %v445, %v536
        %v538 = vlaneseq
        %v539 = vshrl.u32 %v538, 7
        %v540 = vsub.s32 2, %v539
        %v541 = vrot.slane %v446, %v540
        %v545 = vlaneseq
        %v546 = vshrl.u32 %v545, 7
        %v547 = vsub.s32 2, %v546
        %v548 = vrot.slane %v533, %v547
        %v549 = vlaneseq
        %v550 = vshrl.u32 %v549, 7
        %v551 = vsub.s32 2, %v550
        %v552 = vrot.slane %v537, %v551
        %v553 = vlaneseq
        %v554 = vshrl.u32 %v553, 7
        %v555 = vsub.s32 2, %v554
        %v556 = vrot.slane %v541, %v555
        %558 = vset.pattern.permute.xlu0 0
        %559 = vperm.xlu0 %558, %v529
        %v560 = vpop.permute.xlu0 %559
        %v562 = vmul.f32 %v548, %v560
        %v563 = vmul.f32 %v552, %v560
        %v564 = vmul.f32 %v556, %v560
        %v565 = vadd.f32 %v525, %v562
        %v566 = vadd.f32 %v526, %v563
        %v567 = vadd.f32 %v527, %v564
        %s568 = scalar_lea.vmem %s2, 24
        %v569 = vld [vmem:[%s568] sm:$0xff]
        %v570 = vlaneseq
        %v571 = vshrl.u32 %v570, 7
        %v572 = vsub.s32 3, %v571
        %v573 = vrot.slane %v445, %v572
        %v574 = vlaneseq
        %v575 = vshrl.u32 %v574, 7
        %v576 = vsub.s32 7, %v575
        %v577 = vrot.slane %v445, %v576
        %v578 = vlaneseq
        %v579 = vshrl.u32 %v578, 7
        %v580 = vsub.s32 3, %v579
        %v581 = vrot.slane %v446, %v580
        %v585 = vlaneseq
        %v586 = vshrl.u32 %v585, 7
        %v587 = vsub.s32 3, %v586
        %v588 = vrot.slane %v573, %v587
        %v589 = vlaneseq
        %v590 = vshrl.u32 %v589, 7
        %v591 = vsub.s32 3, %v590
        %v592 = vrot.slane %v577, %v591
        %v593 = vlaneseq
        %v594 = vshrl.u32 %v593, 7
        %v595 = vsub.s32 3, %v594
        %v596 = vrot.slane %v581, %v595
        %598 = vset.pattern.permute.xlu0 0
        %599 = vperm.xlu0 %598, %v569
        %v600 = vpop.permute.xlu0 %599
        %v602 = vmul.f32 %v588, %v600
        %v603 = vmul.f32 %v592, %v600
        %v604 = vmul.f32 %v596, %v600
        %v605 = vadd.f32 %v565, %v602
        %v606 = vadd.f32 %v566, %v603
        %v607 = vadd.f32 %v567, %v604
        %608 = vst [vmem:[%s163] sm:$0xff] %v605
        %609 = vst [vmem:[%s163 + $0x8] sm:$0xff] %v606
        %610 = vst [vmem:[%s163 + $0x10] sm:$0xff] %v607
        %s611 = sand.u32 %s93, 1
        %s612 = scalar_lea.sflag [#allocation3], %s611
        %s613 = sand.u32 %s93, 1
        %s614 = smul.addr %s613, 24
        %s615 = scalar_lea.vmem [#allocation2], %s614
        // Predicated region
        $region33: #{tpu_custom_call.1} parent=31 // pred_check
          %p616 = pneg %p103
        $region34: #{tpu_custom_call.1} parent=31 // pred_check_branch
          %618 = sbr.rel (%p616) target = $region36
        $region35: #{tpu_custom_call.1} parent=31 // pred_region
          %s620 = ssub.s32 384, 384
          %621 = vsyncadd %s612, %s620
          %s622 = smul.addr %s17, 3
          %s623 = smul.addr %s622, 128
          %s624 = scalar_lea.hbm %s3, %s623
          %s626 = sshll.u32 %s615, 4
          %s627 = int_to_ptr.vmem [resolvable:$true] %s626
          %629 = dma.vmem_to_hbm [thread:$0]  %s627, 384, %s624, %s612
        $region36: #{tpu_custom_call.1} parent=31 // pred_fallthru
          _
      $region32: #{tpu_custom_call.1} parent=5 // pred_fallthru
        _
      %p630 = scmp.le.s32.totalorder 2, %s12
      // Predicated region
      $region37: #{tpu_custom_call.1} parent=5 // pred_check
        %p631 = pneg %p630
      $region38: #{tpu_custom_call.1} parent=5 // pred_check_branch
        %633 = sbr.rel (%p631) target = $region40
      $region39: #{tpu_custom_call.1} parent=5 // pred_region
        %s634 = ssub.s32 %s12, 2
        // Predicated region
        $region41: #{tpu_custom_call.1} parent=39 // pred_check
          %p635 = pneg %p109
        $region42: #{tpu_custom_call.1} parent=39 // pred_check_branch
          %637 = sbr.rel (%p635) target = $region44
        $region43: #{tpu_custom_call.1} parent=39 // pred_region
          %s638 = sand.u32 %s94, 1
          %s639 = scalar_lea.sflag [#allocation3], %s638
          %s640 = sand.u32 %s94, 1
          %s641 = smul.addr %s640, 24
          %s642 = scalar_lea.vmem [#allocation2], %s641
          %643 = dma.done %s639, 384
        $region44: #{tpu_custom_call.1} parent=39 // pred_fallthru
          _
      $region40: #{tpu_custom_call.1} parent=5 // pred_fallthru
        _
    $region6: #{tpu_custom_call.1} parent=1 // loop_footer
      %s16 = sadd.s32 1, %s12
    $region7: #{tpu_custom_call.1} parent=1 // loop_footer_branch
      %11 = sbr.rel target = $region3
    $region8: #{tpu_custom_call.1} parent=1 // loop_exit
      _
    %644 = vsyncpa [#allocation3], 1
    %s645 = scalar_lea.sflag [#allocation3], 1
    %646 = vsyncpa %s645, 1

</llo_original>
